<compile_context>
chip_gen: v5e
topology: v5e:2x2
jax: 0.10.0
libtpu: 0.0.40
codegen_flags: <defaults>
</compile_context>

<pallas_src>
import jax
import jax.numpy as jnp
from jax.experimental import pallas as pl
from jax.experimental.pallas import tpu as pltpu


def _margin_mse_kernel(tgt_ref, score_ref, headf_ref, w_ref, out_ref):
    """Per-row masked pairwise-MSE partial sums for one batch block."""
    n = tgt_ref.shape[1]

    # Single full-width upcast + subtract for the whole block.
    d = tgt_ref[...].astype(jnp.float32) - score_ref[...].astype(jnp.float32)

    # Per-row centering: pairwise differences are shift-invariant, and it keeps the
    # expanded quadratic form below well conditioned in f32.  It also makes T1 ~ 0,
    # which is what justifies dropping the -2*U*T1 cross term (see module docstring).
    d = d - jnp.sum(d, axis=1, keepdims=True) * jnp.float32(1.0 / n)
    d2 = d * d

    # Two cross-lane reductions against precomputed, VMEM-resident (1, N) weight rows.
    u = jnp.sum(d * headf_ref[...], axis=1, keepdims=True)      # (block_b, 1)
    qh = jnp.sum(d2 * w_ref[...], axis=1, keepdims=True)        # (block_b, 1)

    # Per-row closed form of  sum_{i<n_pos, j>i} (d_i - d_j)^2.
    out_ref[...] = qh + u * u


def margin_mse(tgt_score, score, *, n_pos, margin=0, block_b=None):
    """Pallas implementation of MarginMSE.forward. `margin` is unused (as in the reference)."""
    assert tgt_score.shape == score.shape and tgt_score.ndim == 2
    B, N = tgt_score.shape
    n_pos = int(n_pos)
    in_bytes = jnp.dtype(tgt_score.dtype).itemsize

    # Static per-lane weights derived from mask[i, j] = (i < n_pos) & (j > i):
    #   headf[j] = [j < n_pos]
    #   w[j]     = (N-1-j)*[j<n_pos] + min(j, n_pos) + [j<n_pos]   (merged w2 + headf)
    col = jnp.arange(N, dtype=jnp.int32)
    headf = (col < n_pos).astype(jnp.float32)
    w2 = jnp.where(col < n_pos, (N - 1) - col, 0) + jnp.minimum(col, n_pos)
    w = w2.astype(jnp.float32) + headf
    headf = headf[None, :]                                       # (1, N)
    w = w[None, :]                                               # (1, N)

    if block_b is None:
        # VMEM budget per row: double-buffered inputs (2 arrays x 2 buffers) plus ~4 live
        # (block_b, N) f32 temporaries in the body.  Stay under the 32 MiB scoped default.
        per_row_bytes = (2 * 2 * in_bytes + 4 * 4) * N
        block_b = max(8, (24 * 1024 * 1024) // per_row_bytes)
        block_b = min(block_b, 8192)
    if block_b >= B:
        block_b = B                          # full-extent block always satisfies tiling rules
    else:
        align = 16 if in_bytes < 4 else 8    # bf16 sublane packing wants multiples of 16
        block_b = max(align, (block_b // align) * align)
    num_blocks = pl.cdiv(B, block_b)

    cost = pl.CostEstimate(
        flops=8 * B * N,
        transcendentals=0,
        bytes_accessed=2 * B * N * in_bytes + B * 4 + 2 * N * 4,
    )

    per_row = pl.pallas_call(
        _margin_mse_kernel,
        out_shape=jax.ShapeDtypeStruct((B, 1), jnp.float32),
        grid=(num_blocks,),
        in_specs=[
            pl.BlockSpec((block_b, N), lambda i: (i, 0)),
            pl.BlockSpec((block_b, N), lambda i: (i, 0)),
            pl.BlockSpec((1, N), lambda i: (0, 0)),   # constant block: stays resident in VMEM
            pl.BlockSpec((1, N), lambda i: (0, 0)),
        ],
        out_specs=pl.BlockSpec((block_b, 1), lambda i: (i, 0)),
        compiler_params=pltpu.CompilerParams(
            # Independent per-row partial sums: batch blocks can shard across TensorCores.
            dimension_semantics=("parallel",),
        ),
        cost_estimate=cost,
    )(tgt_score, score, headf, w)

    # nn.MSELoss(reduction='mean') divides by the TOTAL element count B*N*N
    # (masked-out entries contribute zeros but still count in the denominator).
    return jnp.sum(per_row) / jnp.float32(B * N * N)


def _margin_mse_ref(tgt_score, score, n_pos):
    """Pure-JAX reference mirroring the PyTorch forward."""
    t_diff = tgt_score[:, :, None] - tgt_score[:, None, :]
    s_diff = score[:, :, None] - score[:, None, :]
    N = tgt_score.shape[1]
    row = jnp.arange(N)[:, None]
    col = jnp.arange(N)[None, :]
    mask = (row < n_pos) & (col > row)
    t_diff = jnp.where(mask[None], t_diff, 0.0)
    s_diff = jnp.where(mask[None], s_diff, 0.0)
    return jnp.mean((t_diff - s_diff) ** 2)


if __name__ == "__main__":
    key = jax.random.PRNGKey(0)

    # Case 1: small list-wise batch (typical MarginMSE shapes), single full block.
    k1, k2 = jax.random.split(key)
    B, N, n_pos = 4, 8, 2
    tgt_score = jax.random.normal(k1, (B, N), dtype=jnp.float32)
    score = jax.random.normal(k2, (B, N), dtype=jnp.float32)
    out = margin_mse(tgt_score, score, n_pos=n_pos)
    jax.block_until_ready(out)
    ref = _margin_mse_ref(tgt_score, score, n_pos)
    assert jnp.allclose(out, ref, atol=1e-6, rtol=1e-4), (float(out), float(ref))

    # Case 2: exercises the batch grid (multiple blocks + partial last block).
    k3, k4 = jax.random.split(k2)
    B2, N2, n_pos2 = 20, 128, 3
    tgt2 = jax.random.normal(k3, (B2, N2), dtype=jnp.float32)
    score2 = jax.random.normal(k4, (B2, N2), dtype=jnp.float32)
    out2 = margin_mse(tgt2, score2, n_pos=n_pos2, block_b=8)
    jax.block_until_ready(out2)
    ref2 = _margin_mse_ref(tgt2, score2, n_pos2)
    assert jnp.allclose(out2, ref2, atol=1e-6, rtol=1e-4), (float(out2), float(ref2))

    print("KERNEL_OK")
</pallas_src>

<mosaic_0001>
module attributes {stable_mosaic.version = 11 : i64} {
  func.func @_margin_mse_kernel(%arg0: i32, %arg1: memref<4x8xf32, #tpu.memory_space<vmem>>, %arg2: memref<4x8xf32, #tpu.memory_space<vmem>>, %arg3: memref<1x8xf32, #tpu.memory_space<vmem>>, %arg4: memref<1x8xf32, #tpu.memory_space<vmem>>, %arg5: memref<4x1xf32, #tpu.memory_space<vmem>>) attributes {dimension_semantics = [#tpu.dimension_semantics<parallel>], iteration_bounds = array<i64: 1>, scalar_prefetch = 0 : i64, scratch_operands = 0 : i64, tpu.core_type = #tpu.core_type<tc>, window_params = [{transform_indices = @transform_0, window_bounds = array<i64: 4, 8>}, {transform_indices = @transform_1, window_bounds = array<i64: 4, 8>}, {pipeline_mode = #tpu.pipeline_mode<synchronous>, transform_indices = @transform_2, window_bounds = array<i64: 1, 8>}, {pipeline_mode = #tpu.pipeline_mode<synchronous>, transform_indices = @transform_3, window_bounds = array<i64: 1, 8>}, {transform_indices = @transform_4, window_bounds = array<i64: 4, 1>}]} {
    %c0 = arith.constant 0 : index
    %c0_0 = arith.constant 0 : index
    %0 = vector.load %arg1[%c0, %c0_0] : memref<4x8xf32, #tpu.memory_space<vmem>>, vector<4x8xf32>
    %c0_1 = arith.constant 0 : index
    %c0_2 = arith.constant 0 : index
    %1 = vector.load %arg2[%c0_1, %c0_2] : memref<4x8xf32, #tpu.memory_space<vmem>>, vector<4x8xf32>
    %2 = arith.subf %0, %1 : vector<4x8xf32>
    %cst = arith.constant dense<0.000000e+00> : vector<4xf32>
    %3 = vector.multi_reduction <add>, %2, %cst [1] : vector<4x8xf32> to vector<4xf32>
    %4 = vector.shape_cast %3 : vector<4xf32> to vector<4x1xf32>
    %cst_3 = arith.constant 1.250000e-01 : f32
    %5 = vector.broadcast %cst_3 : f32 to vector<4x1xf32>
    %6 = arith.mulf %4, %5 : vector<4x1xf32>
    %7 = vector.broadcast %6 : vector<4x1xf32> to vector<4x8xf32>
    %8 = arith.subf %2, %7 : vector<4x8xf32>
    %9 = arith.mulf %8, %8 : vector<4x8xf32>
    %c0_4 = arith.constant 0 : index
    %c0_5 = arith.constant 0 : index
    %10 = vector.load %arg3[%c0_4, %c0_5] : memref<1x8xf32, #tpu.memory_space<vmem>>, vector<1x8xf32>
    %11 = vector.broadcast %10 : vector<1x8xf32> to vector<4x8xf32>
    %12 = arith.mulf %8, %11 : vector<4x8xf32>
    %cst_6 = arith.constant dense<0.000000e+00> : vector<4xf32>
    %13 = vector.multi_reduction <add>, %12, %cst_6 [1] : vector<4x8xf32> to vector<4xf32>
    %14 = vector.shape_cast %13 : vector<4xf32> to vector<4x1xf32>
    %c0_7 = arith.constant 0 : index
    %c0_8 = arith.constant 0 : index
    %15 = vector.load %arg4[%c0_7, %c0_8] : memref<1x8xf32, #tpu.memory_space<vmem>>, vector<1x8xf32>
    %16 = vector.broadcast %15 : vector<1x8xf32> to vector<4x8xf32>
    %17 = arith.mulf %9, %16 : vector<4x8xf32>
    %cst_9 = arith.constant dense<0.000000e+00> : vector<4xf32>
    %18 = vector.multi_reduction <add>, %17, %cst_9 [1] : vector<4x8xf32> to vector<4xf32>
    %19 = vector.shape_cast %18 : vector<4xf32> to vector<4x1xf32>
    %20 = arith.mulf %14, %14 : vector<4x1xf32>
    %21 = arith.addf %19, %20 : vector<4x1xf32>
    %c0_10 = arith.constant 0 : index
    %c0_11 = arith.constant 0 : index
    %22 = vector.load %arg5[%c0_10, %c0_11] : memref<4x1xf32, #tpu.memory_space<vmem>>, vector<4x1xf32>
    tpu.vector_store %arg5[%c0_10, %c0_11], %21 {strides = array<i32>} : memref<4x1xf32, #tpu.memory_space<vmem>>, vector<4x1xf32>,
    return
  }
  func.func @transform_0(%arg0: i32) -> (i32, i32) {
    %c0_i32 = arith.constant 0 : i32
    %c0_i32_0 = arith.constant 0 : i32
    return %arg0, %c0_i32 : i32, i32
  }
  func.func @transform_1(%arg0: i32) -> (i32, i32) {
    %c0_i32 = arith.constant 0 : i32
    %c0_i32_0 = arith.constant 0 : i32
    return %arg0, %c0_i32 : i32, i32
  }
  func.func @transform_2(%arg0: i32) -> (i32, i32) {
    %c0_i32 = arith.constant 0 : i32
    %c0_i32_0 = arith.constant 0 : i32
    %c0_i32_1 = arith.constant 0 : i32
    return %c0_i32, %c0_i32_0 : i32, i32
  }
  func.func @transform_3(%arg0: i32) -> (i32, i32) {
    %c0_i32 = arith.constant 0 : i32
    %c0_i32_0 = arith.constant 0 : i32
    %c0_i32_1 = arith.constant 0 : i32
    return %c0_i32, %c0_i32_0 : i32, i32
  }
  func.func @transform_4(%arg0: i32) -> (i32, i32) {
    %c0_i32 = arith.constant 0 : i32
    %c0_i32_0 = arith.constant 0 : i32
    return %arg0, %c0_i32 : i32, i32
  }
}

</mosaic_0001>

<llo_original>
// kernel: tpu_custom_call.1
$region0: #{tpu_custom_call.1}
  #allocation0 [shape = 'u32[]', space=smem, size = 0x4, offset = 0x4, fixed_abs, tag = 'smem constant byte address 0x4 - core index']
  #allocation1 [shape = 'u32[72,128]{1,0:T(1,128)}', space=vmem, size = 0x9000, scoped, tag = 'internal scratch']
  %s0 = inlined_call_operand.hbm [shape: f32[4,8], index: 0, kind: input, shape index: {}]
  %s1 = inlined_call_operand.hbm [shape: f32[4,8], index: 1, kind: input, shape index: {}]
  %s2 = inlined_call_operand.vmem [shape: f32[1,8], index: 2, kind: input, shape index: {}]
  %s3 = inlined_call_operand.vmem [shape: f32[1,8], index: 3, kind: input, shape index: {}]
  %s4 = inlined_call_operand.vmem [shape: f32[4,1], index: 4, kind: output, shape index: {}]
  %s5 = sld [smem:[#allocation0]]
  $region34: #{tpu_custom_call.1} parent=0
    _
  %s7 = ssub.s32 1, %s5
  %s8 = scalar_select 0, %s7, %s5
  $region1: #{tpu_custom_call.1} parent=0
    #allocation2 [shape = 'u8[2048]{0}', space=vmem, size = 0x800, scoped, tag = 'input window, operand 0, single buffered']
    #allocation3 [shape = 's32[1]{0}', space=sflag, size = 0x4, scoped, tag = 'scoped memory for tpu_custom_call.1']
    #allocation4 [shape = 'u8[2048]{0}', space=vmem, size = 0x800, scoped, tag = 'input window, operand 1, single buffered']
    #allocation5 [shape = 's32[1]{0}', space=sflag, size = 0x4, scoped, tag = 'scoped memory for tpu_custom_call.1']
    %9 = vsyncpa [#allocation3], 0
    %10 = vsyncpa [#allocation5], 0
    // Predicated region
    $region2: #{tpu_custom_call.1} parent=1 // pred_check
      _
    $region3: #{tpu_custom_call.1} parent=1 // pred_check_branch
      %12 = sbr.rel (0) target = $region5
    $region4: #{tpu_custom_call.1} parent=1 // pred_region
      %14 = vsyncadd [#allocation3], 0
      %s16 = sshll.u32 %s0, 4
      %s17 = int_to_ptr.hbm [resolvable:$true] %s16
      %s18 = sshll.u32 [#allocation2], 4
      %s19 = int_to_ptr.vmem [resolvable:$true] %s18
      %21 = dma.hbm_to_vmem [thread:$0]  %s17, 64, %s19, [#allocation3]
    $region5: #{tpu_custom_call.1} parent=1 // pred_fallthru
      _
    // Predicated region
    $region6: #{tpu_custom_call.1} parent=1 // pred_check
      _
    $region7: #{tpu_custom_call.1} parent=1 // pred_check_branch
      %23 = sbr.rel (0) target = $region9
    $region8: #{tpu_custom_call.1} parent=1 // pred_region
      %25 = vsyncadd [#allocation5], 0
      %s27 = sshll.u32 %s1, 4
      %s28 = int_to_ptr.hbm [resolvable:$true] %s27
      %s29 = sshll.u32 [#allocation4], 4
      %s30 = int_to_ptr.vmem [resolvable:$true] %s29
      %32 = dma.hbm_to_vmem [thread:$0]  %s28, 64, %s30, [#allocation5]
    $region9: #{tpu_custom_call.1} parent=1 // pred_fallthru
      _
    // Predicated region
    $region10: #{tpu_custom_call.1} parent=1 // pred_check
      _
    $region11: #{tpu_custom_call.1} parent=1 // pred_check_branch
      %34 = sbr.rel (0) target = $region13
    $region12: #{tpu_custom_call.1} parent=1 // pred_region
      _
    $region13: #{tpu_custom_call.1} parent=1 // pred_fallthru
      _
    // Predicated region
    $region14: #{tpu_custom_call.1} parent=1 // pred_check
      _
    $region15: #{tpu_custom_call.1} parent=1 // pred_check_branch
      %36 = sbr.rel (0) target = $region17
    $region16: #{tpu_custom_call.1} parent=1 // pred_region
      _
    $region17: #{tpu_custom_call.1} parent=1 // pred_fallthru
      _
    // Predicated region
    $region18: #{tpu_custom_call.1} parent=1 // pred_check
      _
    $region19: #{tpu_custom_call.1} parent=1 // pred_check_branch
      %38 = sbr.rel (0) target = $region21
    $region20: #{tpu_custom_call.1} parent=1 // pred_region
      %40 = dma.done [#allocation3], 64
    $region21: #{tpu_custom_call.1} parent=1 // pred_fallthru
      _
    // Predicated region
    $region22: #{tpu_custom_call.1} parent=1 // pred_check
      _
    $region23: #{tpu_custom_call.1} parent=1 // pred_check_branch
      %42 = sbr.rel (0) target = $region25
    $region24: #{tpu_custom_call.1} parent=1 // pred_region
      %44 = dma.done [#allocation5], 64
    $region25: #{tpu_custom_call.1} parent=1 // pred_fallthru
      _
    %v45 = vld [vmem:[#allocation2] sm:$0xf]
    %v46 = vld [vmem:[#allocation4] sm:$0xf]
    %v47 = vsub.f32 %v45, %v46
    %vm48 = vcmask 60416
    %v49 = vsel %vm48, %v47, 0.0
    %50 = vadd.xlane.f32.xlu0 %v49
    %v51 = vpop.xlane.xlu0 %50
    %v52 = vmul.f32 %v51, 0.125
    %v53 = vsub.f32 %v47, %v52
    %v54 = vmul.f32 %v53, %v53
    %v55 = vld [vmem:[%s2] sm:$0x1]
    %v57 = vperm.slane %v55, 0
    %v59 = vmul.f32 %v53, %v57
    %v60 = vsel %vm48, %v59, 0.0
    %61 = vadd.xlane.f32.xlu0 %v60
    %v62 = vpop.xlane.xlu0 %61
    %v63 = vld [vmem:[%s3] sm:$0x1]
    %v65 = vperm.slane %v63, 0
    %v67 = vmul.f32 %v54, %v65
    %v68 = vsel %vm48, %v67, 0.0
    %69 = vadd.xlane.f32.xlu0 %v68
    %v70 = vpop.xlane.xlu0 %69
    %v71 = vmul.f32 %v62, %v62
    %v72 = vadd.f32 %v70, %v71
    %vm73 = vcmask 3072
    %74 = vst.msk [vmem:[%s4] sm:$0xf] %vm73, %v72
    // Predicated region
    $region26: #{tpu_custom_call.1} parent=1 // pred_check
      _
    $region27: #{tpu_custom_call.1} parent=1 // pred_check_branch
      %76 = sbr.rel (0) target = $region29
    $region28: #{tpu_custom_call.1} parent=1 // pred_region
      _
    $region29: #{tpu_custom_call.1} parent=1 // pred_fallthru
      _
    // Predicated region
    $region30: #{tpu_custom_call.1} parent=1 // pred_check
      _
    $region31: #{tpu_custom_call.1} parent=1 // pred_check_branch
      %78 = sbr.rel (0) target = $region33
    $region32: #{tpu_custom_call.1} parent=1 // pred_region
      _
    $region33: #{tpu_custom_call.1} parent=1 // pred_fallthru
      _
    %79 = vsyncpa [#allocation3], 1
    %80 = vsyncpa [#allocation5], 1

</llo_original>
